<compile_context>
chip_gen: v5e
topology: v5e:2x2
jax: 0.10.0
libtpu: 0.0.40
codegen_flags: <defaults>
</compile_context>

<pallas_src>
import jax
import jax.numpy as jnp
from jax.experimental import pallas as pl
from jax.experimental.pallas import tpu as pltpu

_HIDDEN = 256
_LANE = 128
_SUBLANE = 8


def _cdiv(a, b):
    return -(-a // b)


def _round_up(n, m):
    return _cdiv(n, m) * m


def _gen_kernel(x_ref, w1_ref, b1_ref, w2_ref, b2_ref, o_ref):
    # ---- Linear 1: (tm, z) @ (z, 256) on the MXU, f32 accumulation ----------
    # Casting x to the weight dtype feeds the native bf16 MXU path when the
    # weights are stored in bf16; it is a no-op for f32 weights.
    h = jnp.dot(x_ref[...].astype(w1_ref.dtype), w1_ref[...],
                preferred_element_type=jnp.float32)
    h = h + b1_ref[...]                      # (1, 256) f32 bias broadcast (VPU)
    h = jnp.maximum(h, 0.1 * h)              # LeakyReLU(0.1): single vmax
    # ---- Linear 2: (tm, 256) @ (256, tn) -------------------------------------
    y = jnp.dot(h.astype(w2_ref.dtype), w2_ref[...],
                preferred_element_type=jnp.float32)
    y = y + b2_ref[...]                      # (1, tn) f32 bias
    # tanh lands on the EUP slot — essentially free next to the matmuls.
    o_ref[...] = jnp.tanh(y).astype(o_ref.dtype)


def gan_generator_forward(x, w1, b1, w2, b2, *, tm_max=512, tn_max=2048,
                          out_dtype=None):
    """Fused forward: tanh(leaky_relu(x @ W1 + b1, 0.1) @ W2 + b2).

    x : (B, z_dim)
    w1: (z_dim, 256), b1: (256,)        (weights transposed vs. torch.nn.Linear)
    w2: (256, in_size), b2: (in_size,)
    Returns (B, in_size) in `out_dtype` (default: x.dtype).

    Weights are used in whatever dtype they are passed in — store them in bf16
    between calls for the native MXU path; f32 accumulation is always used.
    No host-side padding / slicing: ragged last tiles use masked writes.
    """
    B, z_dim = x.shape
    hidden = w1.shape[1]
    in_size = w2.shape[1]
    assert w1.shape == (z_dim, hidden) and w2.shape == (hidden, in_size)
    assert b1.shape == (hidden,) and b2.shape == (in_size,)
    assert hidden == _HIDDEN
    out_dtype = x.dtype if out_dtype is None else out_dtype

    # Biases stay f32 inside the kernel (tiny arrays).
    b1_2d = b1.astype(jnp.float32).reshape(1, hidden)
    b2_2d = b2.astype(jnp.float32).reshape(1, in_size)

    # ---- N (output-feature) tile: full dim when it fits, else 128-aligned. ----
    if in_size <= tn_max:
        tn = in_size                      # full array dim -> always legal block
    else:
        tn = _round_up(_cdiv(in_size, _cdiv(in_size, tn_max)), _LANE)
    n_col = _cdiv(in_size, tn)

    # ---- M (row) tile: balanced; >=2 row tiles for mid/large batches so the
    # "parallel" batch axis can shard across both v7x TensorCores. -------------
    if B <= 2 * _SUBLANE:
        n_row = 1
    else:
        n_row = max(2, _cdiv(B, tm_max))
    tm = B if n_row == 1 else _round_up(_cdiv(B, n_row), _SUBLANE)
    n_row = _cdiv(B, tm)

    w_bytes = jnp.dtype(w1.dtype).itemsize
    x_bytes = jnp.dtype(x.dtype).itemsize
    o_bytes = jnp.dtype(out_dtype).itemsize

    # Advisory cost for XLA scheduling (true, unpadded work).
    cost = pl.CostEstimate(
        flops=2 * B * (z_dim * hidden + hidden * in_size),
        transcendentals=B * in_size,
        bytes_accessed=(x.size * x_bytes + w1.size * w_bytes + w2.size * w_bytes
                        + (hidden + in_size) * 4 + B * in_size * o_bytes),
    )

    # VMEM budget: double-buffered x/out tiles + weight blocks + f32
    # intermediates, with headroom; capped so it is safe on v7x (64 MiB phys).
    vmem_est = (2 * tm * z_dim * x_bytes            # x tiles
                + 2 * tm * tn * o_bytes             # out tiles
                + 2 * z_dim * hidden * w_bytes      # W1
                + 2 * hidden * tn * w_bytes         # W2 block(s)
                + (hidden + 2 * tn) * 4             # biases
                + tm * hidden * 4 + tm * tn * 4)    # f32 intermediates
    vmem_limit = int(min(max(2 * vmem_est, 32 << 20), 48 << 20))

    out = pl.pallas_call(
        _gen_kernel,
        out_shape=jax.ShapeDtypeStruct((B, in_size), out_dtype),
        grid_spec=pltpu.PrefetchScalarGridSpec(
            num_scalar_prefetch=0,
            grid=(n_row, n_col),
            in_specs=[
                pl.BlockSpec((tm, z_dim), lambda i, j: (i, 0)),      # x row tile
                pl.BlockSpec((z_dim, hidden), lambda i, j: (0, 0)),  # W1 resident
                pl.BlockSpec((1, hidden), lambda i, j: (0, 0)),      # b1
                pl.BlockSpec((hidden, tn), lambda i, j: (0, j)),     # W2 (N-tiled)
                pl.BlockSpec((1, tn), lambda i, j: (0, j)),          # b2
            ],
            out_specs=pl.BlockSpec((tm, tn), lambda i, j: (i, j)),
        ),
        compiler_params=pltpu.CompilerParams(
            dimension_semantics=("parallel", "parallel"),
            vmem_limit_bytes=vmem_limit),
        cost_estimate=cost,
    )(x, w1, b1_2d, w2, b2_2d)
    return out


def reference_forward(x, w1, b1, w2, b2):
    h = x @ w1 + b1
    h = jnp.where(h > 0, h, 0.1 * h)
    return jnp.tanh(h @ w2 + b2)


if __name__ == "__main__":
    def make_params(key, z, n, dtype=jnp.float32):
        k1, kb1, k2, kb2 = jax.random.split(key, 4)
        w1 = jax.random.normal(k1, (z, _HIDDEN), dtype) * (1.0 / jnp.sqrt(z))
        b1 = jax.random.normal(kb1, (_HIDDEN,), dtype) * 0.01
        w2 = jax.random.normal(k2, (_HIDDEN, n), dtype) * (1.0 / jnp.sqrt(_HIDDEN))
        b2 = jax.random.normal(kb2, (n,), dtype) * 0.01
        return w1, b1, w2, b2

    root = jax.random.PRNGKey(0)
    kx1, kp1, kx2, kp2 = jax.random.split(root, 4)

    # --- Test 1: small shapes, f32, single tile on each axis -----------------
    B, Z, N = 4, 16, 32
    x = jax.random.normal(kx1, (B, Z), jnp.float32)
    w1, b1, w2, b2 = make_params(kp1, Z, N)
    out = jax.block_until_ready(gan_generator_forward(x, w1, b1, w2, b2))
    ref = reference_forward(x, w1, b1, w2, b2)
    assert out.shape == (B, N) and out.dtype == x.dtype
    assert jnp.allclose(out, ref, atol=3e-4, rtol=3e-4), "f32 small-shape mismatch"

    # --- Test 2: ragged batch + ragged in_size + forced N tiling -------------
    B2, Z2, N2 = 50, 20, 300
    x2 = jax.random.normal(kx2, (B2, Z2), jnp.float32)
    w1b, b1b, w2b, b2b = make_params(kp2, Z2, N2)
    out2 = jax.block_until_ready(
        gan_generator_forward(x2, w1b, b1b, w2b, b2b, tm_max=32, tn_max=128))
    ref2 = reference_forward(x2, w1b, b1b, w2b, b2b)
    assert out2.shape == (B2, N2)
    assert jnp.allclose(out2, ref2, atol=3e-4, rtol=3e-4), "f32 tiled mismatch"

    # --- Test 3: bf16-stored weights (cast once, not per call), f32 accum ----
    w1_bf = w1b.astype(jnp.bfloat16)
    w2_bf = w2b.astype(jnp.bfloat16)
    out3 = jax.block_until_ready(
        gan_generator_forward(x2, w1_bf, b1b, w2_bf, b2b))
    assert out3.shape == (B2, N2)
    assert bool(jnp.all(jnp.isfinite(out3)))
    assert float(jnp.max(jnp.abs(out3 - ref2))) < 0.15, "bf16 path diverged"

    print("KERNEL_OK")
</pallas_src>

<mosaic_0001>
module attributes {stable_mosaic.version = 11 : i64} {
  func.func @_gen_kernel(%arg0: i32, %arg1: i32, %arg2: memref<4x16xf32, #tpu.memory_space<vmem>>, %arg3: memref<16x256xf32, #tpu.memory_space<vmem>>, %arg4: memref<1x256xf32, #tpu.memory_space<vmem>>, %arg5: memref<256x32xf32, #tpu.memory_space<vmem>>, %arg6: memref<1x32xf32, #tpu.memory_space<vmem>>, %arg7: memref<4x32xf32, #tpu.memory_space<vmem>>) attributes {dimension_semantics = [#tpu.dimension_semantics<parallel>, #tpu.dimension_semantics<parallel>], iteration_bounds = array<i64: 1, 1>, scalar_prefetch = 0 : i64, scratch_operands = 0 : i64, tpu.core_type = #tpu.core_type<tc>, window_params = [{transform_indices = @transform_0, window_bounds = array<i64: 4, 16>}, {pipeline_mode = #tpu.pipeline_mode<synchronous>, transform_indices = @transform_1, window_bounds = array<i64: 16, 256>}, {pipeline_mode = #tpu.pipeline_mode<synchronous>, transform_indices = @transform_2, window_bounds = array<i64: 1, 256>}, {transform_indices = @transform_3, window_bounds = array<i64: 256, 32>}, {transform_indices = @transform_4, window_bounds = array<i64: 1, 32>}, {transform_indices = @transform_5, window_bounds = array<i64: 4, 32>}]} {
    %c0 = arith.constant 0 : index
    %c0_0 = arith.constant 0 : index
    %0 = vector.load %arg2[%c0, %c0_0] : memref<4x16xf32, #tpu.memory_space<vmem>>, vector<4x16xf32>
    %c0_1 = arith.constant 0 : index
    %c0_2 = arith.constant 0 : index
    %1 = vector.load %arg3[%c0_1, %c0_2] : memref<16x256xf32, #tpu.memory_space<vmem>>, vector<16x256xf32>
    %cst = arith.constant dense<0.000000e+00> : vector<4x256xf32>
    %2 = tpu.matmul %0, %1, %cst {dimension_numbers = #tpu.dot_dimension_numbers<[1], [0], [0], [1], [0, 0, 1, 1], [], []>} : vector<4x16xf32>, vector<16x256xf32>, vector<4x256xf32> -> vector<4x256xf32>
    %c0_3 = arith.constant 0 : index
    %c0_4 = arith.constant 0 : index
    %3 = vector.load %arg4[%c0_3, %c0_4] : memref<1x256xf32, #tpu.memory_space<vmem>>, vector<1x256xf32>
    %4 = vector.broadcast %3 : vector<1x256xf32> to vector<4x256xf32>
    %5 = arith.addf %2, %4 : vector<4x256xf32>
    %cst_5 = arith.constant 1.000000e-01 : f32
    %6 = vector.broadcast %cst_5 : f32 to vector<4x256xf32>
    %7 = arith.mulf %6, %5 : vector<4x256xf32>
    %8 = arith.maximumf %5, %7 : vector<4x256xf32>
    %c0_6 = arith.constant 0 : index
    %c0_7 = arith.constant 0 : index
    %9 = vector.load %arg5[%c0_6, %c0_7] : memref<256x32xf32, #tpu.memory_space<vmem>>, vector<256x32xf32>
    %cst_8 = arith.constant dense<0.000000e+00> : vector<4x32xf32>
    %10 = tpu.matmul %8, %9, %cst_8 {dimension_numbers = #tpu.dot_dimension_numbers<[1], [0], [0], [1], [0, 0, 1, 1], [], []>} : vector<4x256xf32>, vector<256x32xf32>, vector<4x32xf32> -> vector<4x32xf32>
    %c0_9 = arith.constant 0 : index
    %c0_10 = arith.constant 0 : index
    %11 = vector.load %arg6[%c0_9, %c0_10] : memref<1x32xf32, #tpu.memory_space<vmem>>, vector<1x32xf32>
    %12 = vector.broadcast %11 : vector<1x32xf32> to vector<4x32xf32>
    %13 = arith.addf %10, %12 : vector<4x32xf32>
    %14 = math.tanh %13 : vector<4x32xf32>
    %c0_11 = arith.constant 0 : index
    %c0_12 = arith.constant 0 : index
    %15 = vector.load %arg7[%c0_11, %c0_12] : memref<4x32xf32, #tpu.memory_space<vmem>>, vector<4x32xf32>
    tpu.vector_store %arg7[%c0_11, %c0_12], %14 {strides = array<i32>} : memref<4x32xf32, #tpu.memory_space<vmem>>, vector<4x32xf32>,
    return
  }
  func.func @transform_0(%arg0: i32, %arg1: i32) -> (i32, i32) {
    %c0_i32 = arith.constant 0 : i32
    %c0_i32_0 = arith.constant 0 : i32
    return %arg0, %c0_i32 : i32, i32
  }
  func.func @transform_1(%arg0: i32, %arg1: i32) -> (i32, i32) {
    %c0_i32 = arith.constant 0 : i32
    %c0_i32_0 = arith.constant 0 : i32
    %c0_i32_1 = arith.constant 0 : i32
    return %c0_i32, %c0_i32_0 : i32, i32
  }
  func.func @transform_2(%arg0: i32, %arg1: i32) -> (i32, i32) {
    %c0_i32 = arith.constant 0 : i32
    %c0_i32_0 = arith.constant 0 : i32
    %c0_i32_1 = arith.constant 0 : i32
    return %c0_i32, %c0_i32_0 : i32, i32
  }
  func.func @transform_3(%arg0: i32, %arg1: i32) -> (i32, i32) {
    %c0_i32 = arith.constant 0 : i32
    %c0_i32_0 = arith.constant 0 : i32
    return %c0_i32, %arg1 : i32, i32
  }
  func.func @transform_4(%arg0: i32, %arg1: i32) -> (i32, i32) {
    %c0_i32 = arith.constant 0 : i32
    %c0_i32_0 = arith.constant 0 : i32
    return %c0_i32, %arg1 : i32, i32
  }
  func.func @transform_5(%arg0: i32, %arg1: i32) -> (i32, i32) {
    %c0_i32 = arith.constant 0 : i32
    return %arg0, %arg1 : i32, i32
  }
}

</mosaic_0001>

<llo_original>
// kernel: tpu_custom_call.1
$region0: #{tpu_custom_call.1}
  #allocation0 [shape = 'u32[]', space=smem, size = 0x4, offset = 0x4, fixed_abs, tag = 'smem constant byte address 0x4 - core index']
  #allocation1 [shape = 'u32[72,128]{1,0:T(1,128)}', space=vmem, size = 0x9000, scoped, tag = 'internal scratch']
  %s0 = inlined_call_operand.vmem [shape: f32[4,16], index: 0, kind: input, shape index: {}]
  %s1 = inlined_call_operand.vmem [shape: f32[16,256], index: 1, kind: input, shape index: {}]
  %s2 = inlined_call_operand.vmem [shape: f32[1,256], index: 2, kind: input, shape index: {}]
  %s3 = inlined_call_operand.vmem [shape: f32[256,32], index: 3, kind: input, shape index: {}]
  %s4 = inlined_call_operand.vmem [shape: f32[1,32], index: 4, kind: input, shape index: {}]
  %s5 = inlined_call_operand.hbm [shape: f32[4,32], index: 5, kind: output, shape index: {}]
  %s6 = sld [smem:[#allocation0]]
  $region30: #{tpu_custom_call.1} parent=0
    _
  %s8 = ssub.s32 1, %s6
  %s9 = scalar_select 0, %s8, %s6
  $region1: #{tpu_custom_call.1} parent=0
    #allocation2 [shape = 'u8[2048]{0}', space=vmem, size = 0x800, scoped, tag = 'output window, operand 0, single buffered']
    #allocation3 [shape = 's32[1]{0}', space=sflag, size = 0x4, scoped, tag = 'scoped memory for tpu_custom_call.1']
    %10 = vsyncpa [#allocation3], 0
    // Predicated region
    $region2: #{tpu_custom_call.1} parent=1 // pred_check
      _
    $region3: #{tpu_custom_call.1} parent=1 // pred_check_branch
      %12 = sbr.rel (0) target = $region5
    $region4: #{tpu_custom_call.1} parent=1 // pred_region
      _
    $region5: #{tpu_custom_call.1} parent=1 // pred_fallthru
      _
    // Predicated region
    $region6: #{tpu_custom_call.1} parent=1 // pred_check
      _
    $region7: #{tpu_custom_call.1} parent=1 // pred_check_branch
      %14 = sbr.rel (0) target = $region9
    $region8: #{tpu_custom_call.1} parent=1 // pred_region
      _
    $region9: #{tpu_custom_call.1} parent=1 // pred_fallthru
      _
    // Predicated region
    $region10: #{tpu_custom_call.1} parent=1 // pred_check
      _
    $region11: #{tpu_custom_call.1} parent=1 // pred_check_branch
      %16 = sbr.rel (0) target = $region13
    $region12: #{tpu_custom_call.1} parent=1 // pred_region
      _
    $region13: #{tpu_custom_call.1} parent=1 // pred_fallthru
      _
    // Predicated region
    $region14: #{tpu_custom_call.1} parent=1 // pred_check
      _
    $region15: #{tpu_custom_call.1} parent=1 // pred_check_branch
      %18 = sbr.rel (0) target = $region17
    $region16: #{tpu_custom_call.1} parent=1 // pred_region
      _
    $region17: #{tpu_custom_call.1} parent=1 // pred_fallthru
      _
    // Predicated region
    $region18: #{tpu_custom_call.1} parent=1 // pred_check
      _
    $region19: #{tpu_custom_call.1} parent=1 // pred_check_branch
      %20 = sbr.rel (0) target = $region21
    $region20: #{tpu_custom_call.1} parent=1 // pred_region
      _
    $region21: #{tpu_custom_call.1} parent=1 // pred_fallthru
      _
    %v21 = vld [vmem:[%s0] sm:$0xf]
    %v22 = vld [vmem:[%s1] sm:$0xff]
    %v23 = vld [vmem:[%s1 + $0x8] sm:$0xff]
    %v24 = vld [vmem:[%s1 + $0x10] sm:$0xff]
    %v25 = vld [vmem:[%s1 + $0x18] sm:$0xff]
    %v26 = vld [vmem:[%s2] sm:$0x3]
    %v28 = vperm.slane %v26, 0
    %v29 = vperm.slane %v26, 1
    %vm32 = vcmask 130048
    %v34 = vsel %vm32, %v21, 0
    %36 = vmatpush.msra.mxu0 0.0
    %37 = vmatpush.msra.mxu0 0.0
    %38 = vmatpush.msra.mxu0 0.0
    %39 = vmatpush.msra.mxu0 0.0
    %40 = vmatpush.msra.mxu0 0.0
    %41 = vmatpush.msra.mxu0 0.0
    %42 = vmatpush.msra.mxu0 0.0
    %43 = vmatpush.msra.mxu0 0.0
    %44 = vmatpush.msra.mxu0 0.0
    %45 = vmatpush.msra.mxu0 0.0
    %46 = vmatpush.msra.mxu0 0.0
    %47 = vmatpush.msra.mxu0 0.0
    %48 = vmatpush.msra.mxu0 0.0
    %49 = vmatpush.msra.mxu0 0.0
    %50 = vmatpush.msra.mxu0 %v24
    %51 = vmatpush.msra.mxu0 %v22
    %52 = vmatmul.f32.gmra.mxu0 %v34
    %v53 = vpop.f32.mrf.mxu0
    %v54 = vadd.f32 %v28, %v53
    %55 = vdwg.mxu0
    %56 = vmatpush.msra.mxu0 0.0
    %57 = vmatpush.msra.mxu0 0.0
    %58 = vmatpush.msra.mxu0 0.0
    %59 = vmatpush.msra.mxu0 0.0
    %60 = vmatpush.msra.mxu0 0.0
    %61 = vmatpush.msra.mxu0 0.0
    %62 = vmatpush.msra.mxu0 0.0
    %63 = vmatpush.msra.mxu0 0.0
    %64 = vmatpush.msra.mxu0 0.0
    %65 = vmatpush.msra.mxu0 0.0
    %66 = vmatpush.msra.mxu0 0.0
    %67 = vmatpush.msra.mxu0 0.0
    %68 = vmatpush.msra.mxu0 0.0
    %69 = vmatpush.msra.mxu0 0.0
    %70 = vmatpush.msra.mxu0 %v25
    %71 = vmatpush.msra.mxu0 %v23
    %72 = vmatmul.f32.gmra.mxu0 %v34
    %v73 = vpop.f32.mrf.mxu0
    %v74 = vadd.f32 %v29, %v73
    %75 = vdwg.mxu0
    %v76 = vmul.f32 %v54, 0.1
    %v77 = vmul.f32 %v74, 0.1
    %v78 = vmax.f32 %v54, %v76
    %v79 = vmax.f32 %v74, %v77
    %v80 = vld [vmem:[%s3] sm:$0xff]
    %v81 = vld [vmem:[%s3 + $0x8] sm:$0xff]
    %v82 = vld [vmem:[%s3 + $0x10] sm:$0xff]
    %v83 = vld [vmem:[%s3 + $0x18] sm:$0xff]
    %v84 = vld [vmem:[%s3 + $0x20] sm:$0xff]
    %v85 = vld [vmem:[%s3 + $0x28] sm:$0xff]
    %v86 = vld [vmem:[%s3 + $0x30] sm:$0xff]
    %v87 = vld [vmem:[%s3 + $0x38] sm:$0xff]
    %v88 = vld [vmem:[%s3 + $0x40] sm:$0xff]
    %v89 = vld [vmem:[%s3 + $0x48] sm:$0xff]
    %v90 = vld [vmem:[%s3 + $0x50] sm:$0xff]
    %v91 = vld [vmem:[%s3 + $0x58] sm:$0xff]
    %v92 = vld [vmem:[%s3 + $0x60] sm:$0xff]
    %v93 = vld [vmem:[%s3 + $0x68] sm:$0xff]
    %v94 = vld [vmem:[%s3 + $0x70] sm:$0xff]
    %v95 = vld [vmem:[%s3 + $0x78] sm:$0xff]
    %v96 = vld [vmem:[%s3 + $0x80] sm:$0xff]
    %v97 = vld [vmem:[%s3 + $0x88] sm:$0xff]
    %v98 = vld [vmem:[%s3 + $0x90] sm:$0xff]
    %v99 = vld [vmem:[%s3 + $0x98] sm:$0xff]
    %v100 = vld [vmem:[%s3 + $0xa0] sm:$0xff]
    %v101 = vld [vmem:[%s3 + $0xa8] sm:$0xff]
    %v102 = vld [vmem:[%s3 + $0xb0] sm:$0xff]
    %v103 = vld [vmem:[%s3 + $0xb8] sm:$0xff]
    %v104 = vld [vmem:[%s3 + $0xc0] sm:$0xff]
    %v105 = vld [vmem:[%s3 + $0xc8] sm:$0xff]
    %v106 = vld [vmem:[%s3 + $0xd0] sm:$0xff]
    %v107 = vld [vmem:[%s3 + $0xd8] sm:$0xff]
    %v108 = vld [vmem:[%s3 + $0xe0] sm:$0xff]
    %v109 = vld [vmem:[%s3 + $0xe8] sm:$0xff]
    %v110 = vld [vmem:[%s3 + $0xf0] sm:$0xff]
    %v111 = vld [vmem:[%s3 + $0xf8] sm:$0xff]
    %v112 = vld [vmem:[%s4] sm:$0x1]
    %v114 = vperm.slane %v112, 0
    %116 = vmatpush.msra.mxu0 %v95
    %117 = vmatpush.msra.mxu0 %v94
    %118 = vmatpush.msra.mxu0 %v93
    %119 = vmatpush.msra.mxu0 %v92
    %120 = vmatpush.msra.mxu0 %v91
    %121 = vmatpush.msra.mxu0 %v90
    %122 = vmatpush.msra.mxu0 %v89
    %123 = vmatpush.msra.mxu0 %v88
    %124 = vmatpush.msra.mxu0 %v87
    %125 = vmatpush.msra.mxu0 %v86
    %126 = vmatpush.msra.mxu0 %v85
    %127 = vmatpush.msra.mxu0 %v84
    %128 = vmatpush.msra.mxu0 %v83
    %129 = vmatpush.msra.mxu0 %v82
    %130 = vmatpush.msra.mxu0 %v81
    %131 = vmatpush.msra.mxu0 %v80
    %132 = vmatmul.f32.gmra.mxu0 %v78
    %v133 = vpop.f32.mrf.mxu0
    %v134 = vadd.f32 %v114, %v133
    %135 = vdwg.mxu0
    %136 = vmatpush.msra.mxu0 %v111
    %137 = vmatpush.msra.mxu0 %v110
    %138 = vmatpush.msra.mxu0 %v109
    %139 = vmatpush.msra.mxu0 %v108
    %140 = vmatpush.msra.mxu0 %v107
    %141 = vmatpush.msra.mxu0 %v106
    %142 = vmatpush.msra.mxu0 %v105
    %143 = vmatpush.msra.mxu0 %v104
    %144 = vmatpush.msra.mxu0 %v103
    %145 = vmatpush.msra.mxu0 %v102
    %146 = vmatpush.msra.mxu0 %v101
    %147 = vmatpush.msra.mxu0 %v100
    %148 = vmatpush.msra.mxu0 %v99
    %149 = vmatpush.msra.mxu0 %v98
    %150 = vmatpush.msra.mxu0 %v97
    %151 = vmatpush.msra.mxu0 %v96
    %152 = vmatmul.f32.gmra.mxu0 %v79
    %v153 = vpop.f32.mrf.mxu0
    %v154 = vadd.f32 %v134, %v153
    %155 = vdwg.mxu0
    %v156 = vtanh.pop %v154
    %vm157 = vcmask 257024
    %158 = vst.msk [vmem:[#allocation2] sm:$0xf] %vm157, %v156
    // Predicated region
    $region22: #{tpu_custom_call.1} parent=1 // pred_check
      _
    $region23: #{tpu_custom_call.1} parent=1 // pred_check_branch
      %160 = sbr.rel (0) target = $region25
    $region24: #{tpu_custom_call.1} parent=1 // pred_region
      %162 = vsyncadd [#allocation3], 0
      %s164 = sshll.u32 [#allocation2], 4
      %s165 = int_to_ptr.vmem [resolvable:$true] %s164
      %s166 = sshll.u32 %s5, 4
      %s167 = int_to_ptr.hbm [resolvable:$true] %s166
      %169 = dma.vmem_to_hbm [thread:$0]  %s165, 64, %s167, [#allocation3]
    $region25: #{tpu_custom_call.1} parent=1 // pred_fallthru
      _
    // Predicated region
    $region26: #{tpu_custom_call.1} parent=1 // pred_check
      _
    $region27: #{tpu_custom_call.1} parent=1 // pred_check_branch
      %171 = sbr.rel (0) target = $region29
    $region28: #{tpu_custom_call.1} parent=1 // pred_region
      %173 = dma.done [#allocation3], 64
    $region29: #{tpu_custom_call.1} parent=1 // pred_fallthru
      _
    %174 = vsyncpa [#allocation3], 1

</llo_original>
